<compile_context>
chip_gen: v6e
topology: v6e:2x2x1
jax: 0.10.0
libtpu: 0.0.40
codegen_flags: <defaults>
</compile_context>

<pallas_src>
import math

import jax
import jax.numpy as jnp
from jax import lax
from jax.experimental import pallas as pl
from jax.experimental.pallas import tpu as pltpu


# ---------------------------------------------------------------------------
# helpers
# ---------------------------------------------------------------------------

def _make_silu(approx):
    def silu(y):
        # y * sigmoid(y); reciprocal on the EUP slot (approx only on bf16 path).
        return y * pl.reciprocal(1.0 + jnp.exp(-y), approx=approx)
    return silu


def _vmem_settings(budget_override=None):
    """Per-generation tile budget + scoped-VMEM limit."""
    cap = 64 << 20
    try:
        info = pltpu.get_tpu_info()
        cap = int(getattr(info, "vmem_capacity_bytes", cap))
    except Exception:
        pass
    if cap <= (64 << 20):                 # v7x-class TensorCore (64 MiB VMEM)
        budget, limit = 20 << 20, 48 << 20
    else:                                 # v5e / v6e (128 MiB VMEM)
        budget, limit = 40 << 20, 64 << 20
    if budget_override is not None:
        budget = int(budget_override)
    return budget, limit


def _spatial_tile(S, in_bytes_per_col, out_bytes_per_col, budget):
    """Lane-dense spatial tile for the 1x1 kernels (double-buffered in+out)."""
    per_col = 2 * (in_bytes_per_col + out_bytes_per_col) + 64
    t = budget // max(per_col, 1)
    t = max(512, (t // 128) * 128)
    return int(S) if S <= t else int(t)


def _pick_row_tile(H, W, c_in, c_out, itemsize, budget, row_unit):
    """Row tile for the fused bottleneck kernel (multiple of row_unit dividing
    H); returns H (whole image) when tiling is not possible."""
    if H % row_unit != 0 or H // row_unit < 2:
        return H
    per_row = W * ((c_in + c_out) * (2 * itemsize + 8) + 9 * c_in * itemsize)
    max_tr = budget // max(per_row, 1)
    cands = [t for t in range(row_unit, H, row_unit)
             if H % t == 0 and t <= max_tr]
    if cands:
        return max(cands)
    return row_unit


# ---------------------------------------------------------------------------
# 1x1 conv kernels (dual-output cv1/cv2 and dual-input fused concat+cv3)
# ---------------------------------------------------------------------------

def _make_dual_out_kernel(approx):
    silu = _make_silu(approx)

    def kernel(x_ref, w1_ref, b1_ref, w2_ref, b2_ref, o1_ref, o2_ref):
        x = x_ref[...].astype(w1_ref.dtype)                 # read x once
        y1 = jnp.dot(w1_ref[...], x,
                     preferred_element_type=jnp.float32) + b1_ref[...]
        o1_ref[...] = silu(y1).astype(o1_ref.dtype)
        y2 = jnp.dot(w2_ref[...], x,
                     preferred_element_type=jnp.float32) + b2_ref[...]
        o2_ref[...] = silu(y2).astype(o2_ref.dtype)

    return kernel


def _conv1x1_dual_out(x, w1, b1, w2, b2, *, out_dtype, approx, budget,
                      vmem_limit):
    N, Cin, S = x.shape
    C1o, C2o = w1.shape[0], w2.shape[0]
    in_b = Cin * jnp.dtype(x.dtype).itemsize
    out_b = (C1o + C2o) * jnp.dtype(out_dtype).itemsize
    ts = _spatial_tile(S, in_b, out_b, budget)
    grid = (N, pl.cdiv(S, ts))
    return pl.pallas_call(
        _make_dual_out_kernel(approx),
        out_shape=(jax.ShapeDtypeStruct((N, C1o, S), out_dtype),
                   jax.ShapeDtypeStruct((N, C2o, S), out_dtype)),
        grid_spec=pltpu.PrefetchScalarGridSpec(
            num_scalar_prefetch=0,
            grid=grid,
            in_specs=[
                pl.BlockSpec((None, Cin, ts), lambda n, s: (n, 0, s)),
                pl.BlockSpec((C1o, Cin), lambda n, s: (0, 0)),
                pl.BlockSpec((C1o, 1), lambda n, s: (0, 0)),
                pl.BlockSpec((C2o, Cin), lambda n, s: (0, 0)),
                pl.BlockSpec((C2o, 1), lambda n, s: (0, 0)),
            ],
            out_specs=(
                pl.BlockSpec((None, C1o, ts), lambda n, s: (n, 0, s)),
                pl.BlockSpec((None, C2o, ts), lambda n, s: (n, 0, s)),
            ),
        ),
        compiler_params=pltpu.CompilerParams(
            dimension_semantics=("parallel", "parallel"),
            vmem_limit_bytes=vmem_limit),
    )(x, w1, b1, w2, b2)


def _make_dual_in_kernel(approx):
    silu = _make_silu(approx)

    def kernel(xa_ref, xb_ref, wa_ref, wb_ref, b_ref, o_ref):
        ya = jnp.dot(wa_ref[...], xa_ref[...].astype(wa_ref.dtype),
                     preferred_element_type=jnp.float32)
        yb = jnp.dot(wb_ref[...], xb_ref[...].astype(wb_ref.dtype),
                     preferred_element_type=jnp.float32)
        o_ref[...] = silu(ya + yb + b_ref[...]).astype(o_ref.dtype)

    return kernel


def _conv1x1_dual_in(xa, xb, wa, wb, b, *, out_dtype, approx, budget,
                     vmem_limit):
    N, Ca, S = xa.shape
    Cb = xb.shape[1]
    Cout = wa.shape[0]
    in_b = (Ca * jnp.dtype(xa.dtype).itemsize
            + Cb * jnp.dtype(xb.dtype).itemsize)
    out_b = Cout * jnp.dtype(out_dtype).itemsize
    ts = _spatial_tile(S, in_b, out_b, budget)
    grid = (N, pl.cdiv(S, ts))
    return pl.pallas_call(
        _make_dual_in_kernel(approx),
        out_shape=jax.ShapeDtypeStruct((N, Cout, S), out_dtype),
        grid_spec=pltpu.PrefetchScalarGridSpec(
            num_scalar_prefetch=0,
            grid=grid,
            in_specs=[
                pl.BlockSpec((None, Ca, ts), lambda n, s: (n, 0, s)),
                pl.BlockSpec((None, Cb, ts), lambda n, s: (n, 0, s)),
                pl.BlockSpec((Cout, Ca), lambda n, s: (0, 0)),
                pl.BlockSpec((Cout, Cb), lambda n, s: (0, 0)),
                pl.BlockSpec((Cout, 1), lambda n, s: (0, 0)),
            ],
            out_specs=pl.BlockSpec((None, Cout, ts), lambda n, s: (n, 0, s)),
        ),
        compiler_params=pltpu.CompilerParams(
            dimension_semantics=("parallel", "parallel"),
            vmem_limit_bytes=vmem_limit),
    )(xa, xb, wa, wb, b)


# ---------------------------------------------------------------------------
# fused Bottleneck kernel: t = SiLU(W1 @ x + b1); y = SiLU(conv3x3(t) + b2) + x
# ---------------------------------------------------------------------------

def _make_bottleneck_kernel(*, TR, W, H, halo, row_unit, shortcut, approx):
    silu = _make_silu(approx)
    L = TR * W                                # interior spatial columns
    HALO = 1 if halo else 0
    St = (TR + 2 * HALO) * W                  # with halo rows
    taps = [(dy, dx) for dy in (-1, 0, 1) for dx in (-1, 0, 1)]

    def kernel(*refs):
        if halo:
            (xm_ref, xt_ref, xb_ref,
             w1_ref, b1_ref, w2_ref, b2_ref, o_ref) = refs
        else:
            xm_ref, w1_ref, b1_ref, w2_ref, b2_ref, o_ref = refs
        r = pl.program_id(1)
        cdt = w1_ref.dtype
        c_in = xm_ref.shape[0]

        xm = xm_ref[...]                                       # (Cin, TR, W)
        if halo:
            xh = jnp.concatenate(
                [xt_ref[:, row_unit - 1:row_unit, :],          # top halo row
                 xm,
                 xb_ref[:, 0:1, :]],                           # bottom halo row
                axis=1)                                        # (Cin, TR+2, W)
        else:
            xh = xm
        xf = xh.reshape(c_in, St).astype(cdt)

        # Fused Bottleneck cv1: 1x1 conv + folded BN + SiLU (recomputed on the
        # halo rows, so no HBM round trip for the intermediate).
        t = silu(jnp.dot(w1_ref[...], xf,
                         preferred_element_type=jnp.float32) + b1_ref[...])
        t = t.astype(cdt)                                      # (c_, St)

        # In-kernel boundary masks (no HBM mask array).
        pidx = lax.broadcasted_iota(jnp.int32, (1, L), 1)
        rowid = pidx // W
        colid = pidx - rowid * W
        grow = rowid + r * TR                                  # global image row

        pieces = []
        for dy, dx in taps:
            off = (dy + HALO) * W + dx
            sl = pltpu.roll(t, (-off) % St, axis=1) if (off % St) else t
            if St != L:
                sl = sl[:, :L]
            conds = []
            if dy == -1:
                conds.append(grow >= 1)
            elif dy == 1:
                conds.append(grow < H - 1)
            if dx == -1:
                conds.append(colid >= 1)
            elif dx == 1:
                conds.append(colid < W - 1)
            if conds:                                          # center tap skipped
                m = conds[0]
                for c in conds[1:]:
                    m = m & c
                sl = jnp.where(m, sl, 0)
            pieces.append(sl)
        stacked = jnp.concatenate(pieces, axis=0)              # (9*c_, L)

        # Fused Bottleneck cv2: 3x3 conv as ONE MXU matmul (9x contraction).
        y = jnp.dot(w2_ref[...], stacked,
                    preferred_element_type=jnp.float32) + b2_ref[...]
        y = silu(y)
        if shortcut:
            y = y + xm.reshape(c_in, L).astype(jnp.float32)
        o_ref[...] = y.reshape(y.shape[0], TR, W).astype(o_ref.dtype)

    return kernel


def _bottleneck_call(x, w1, b1, w2s, b2, *, shortcut, approx, budget,
                     vmem_limit):
    N, Cin, H, W = x.shape
    Cout = w2s.shape[0]
    itemsize = jnp.dtype(x.dtype).itemsize
    row_unit = 16 if itemsize < 4 else 8
    TR = _pick_row_tile(H, W, Cin, Cout, itemsize, budget, row_unit)
    halo = TR < H
    R = H // TR if halo else 1
    if not halo:
        TR = H

    kernel = _make_bottleneck_kernel(TR=TR, W=W, H=H, halo=halo,
                                     row_unit=row_unit, shortcut=shortcut,
                                     approx=approx)

    in_specs = [pl.BlockSpec((None, Cin, TR, W), lambda n, r: (n, 0, r, 0))]
    args = [x]
    if halo:
        TRB = TR // row_unit
        HBLK = H // row_unit
        # Two extra row-aligned views of x supply the +/-1-row halo.  Their
        # index maps are clamped into range; the (rare) clamped/garbage halo
        # rows are zeroed by the in-kernel row-validity masks.
        in_specs += [
            pl.BlockSpec((None, Cin, row_unit, W),
                         lambda n, r: (n, 0, jnp.maximum(r * TRB - 1, 0), 0)),
            pl.BlockSpec((None, Cin, row_unit, W),
                         lambda n, r: (n, 0, jnp.minimum((r + 1) * TRB,
                                                         HBLK - 1), 0)),
        ]
        args += [x, x]
    in_specs += [
        pl.BlockSpec((w1.shape[0], Cin), lambda n, r: (0, 0)),
        pl.BlockSpec((w1.shape[0], 1), lambda n, r: (0, 0)),
        pl.BlockSpec((Cout, w2s.shape[1]), lambda n, r: (0, 0)),
        pl.BlockSpec((Cout, 1), lambda n, r: (0, 0)),
    ]
    args += [w1, b1, w2s, b2]

    return pl.pallas_call(
        kernel,
        out_shape=jax.ShapeDtypeStruct((N, Cout, H, W), x.dtype),
        grid_spec=pltpu.PrefetchScalarGridSpec(
            num_scalar_prefetch=0,
            grid=(N, R),
            in_specs=in_specs,
            out_specs=pl.BlockSpec((None, Cout, TR, W),
                                   lambda n, r: (n, 0, r, 0)),
        ),
        compiler_params=pltpu.CompilerParams(
            dimension_semantics=("parallel", "parallel"),
            vmem_limit_bytes=vmem_limit),
    )(*args)


# ---------------------------------------------------------------------------
# C3 forward (Pallas) and parameter construction
# ---------------------------------------------------------------------------

def c3_forward_pallas(x_nchw, params, shortcut=True,
                      compute_dtype=jnp.bfloat16, vmem_budget_bytes=None):
    """x_nchw: (N, c1, H, W) f32. Returns (N, c2, H, W) in x's dtype."""
    N, C1, H, W = x_nchw.shape
    S = H * W
    cdt = jnp.dtype(compute_dtype)
    approx = cdt.itemsize < 4                # approx EUP recip only on bf16 path
    budget, vmem_limit = _vmem_settings(vmem_budget_bytes)

    x = x_nchw.reshape(N, C1, S)             # free reshape, still NCHW

    cv1w = params["cv1"]["w"][:, :, 0, 0].astype(cdt)
    cv1b = params["cv1"]["b"].reshape(-1, 1).astype(jnp.float32)
    cv2w = params["cv2"]["w"][:, :, 0, 0].astype(cdt)
    cv2b = params["cv2"]["b"].reshape(-1, 1).astype(jnp.float32)
    y1, y2 = _conv1x1_dual_out(x, cv1w, cv1b, cv2w, cv2b, out_dtype=cdt,
                               approx=approx, budget=budget,
                               vmem_limit=vmem_limit)

    c_ = cv1w.shape[0]
    m = y1.reshape(N, c_, H, W)
    for blk in params["m"]:
        w1 = blk["cv1"]["w"][:, :, 0, 0].astype(cdt)
        b1 = blk["cv1"]["b"].reshape(-1, 1).astype(jnp.float32)
        w2s = jnp.concatenate(
            [blk["cv2"]["w"][:, :, dy + 1, dx + 1]
             for dy in (-1, 0, 1) for dx in (-1, 0, 1)], axis=1).astype(cdt)
        b2 = blk["cv2"]["b"].reshape(-1, 1).astype(jnp.float32)
        m = _bottleneck_call(m, w1, b1, w2s, b2, shortcut=shortcut,
                             approx=approx, budget=budget,
                             vmem_limit=vmem_limit)
    m = m.reshape(N, c_, S)

    w3 = params["cv3"]["w"][:, :, 0, 0]                    # (c2, 2c_)
    wa = w3[:, :c_].astype(cdt)
    wb = w3[:, c_:].astype(cdt)
    b3 = params["cv3"]["b"].reshape(-1, 1).astype(jnp.float32)
    out = _conv1x1_dual_in(m, y2, wa, wb, b3, out_dtype=x_nchw.dtype,
                           approx=approx, budget=budget,
                           vmem_limit=vmem_limit)          # fused concat + cv3
    C2 = w3.shape[0]
    return out.reshape(N, C2, H, W)


def _init_conv(key, cin, cout, k):
    """Conv2d(cin, cout, k, bias=False) + BatchNorm2d(cout) (eval mode),
    with BN folded into the conv weight / bias."""
    kw, kg = jax.random.split(key)
    w = jax.random.normal(kw, (cout, cin, k, k), jnp.float32)
    w = w * (1.0 / math.sqrt(cin * k * k))
    gamma = 1.0 + 0.05 * jax.random.normal(kg, (cout,), jnp.float32)
    beta = 0.02 * jnp.arange(cout, dtype=jnp.float32) - 0.1
    running_mean = 0.01 * jnp.arange(cout, dtype=jnp.float32)
    running_var = 1.0 + 0.03 * jnp.arange(cout, dtype=jnp.float32)
    eps = 1e-5
    scale = gamma / jnp.sqrt(running_var + eps)
    return {"w": w * scale.reshape(-1, 1, 1, 1),            # folded, OIHW
            "b": beta - running_mean * scale}                # folded bias


def init_c3_params(key, c1, c2, n=1, e=0.5):
    c_ = int(c2 * e)
    keys = jax.random.split(key, 3 + 2 * n)
    params = {
        "cv1": _init_conv(keys[0], c1, c_, 1),
        "cv2": _init_conv(keys[1], c1, c_, 1),
        "cv3": _init_conv(keys[2], 2 * c_, c2, 1),
        "m": [],
    }
    for i in range(n):
        params["m"].append({
            "cv1": _init_conv(keys[3 + 2 * i], c_, c_, 1),
            "cv2": _init_conv(keys[4 + 2 * i], c_, c_, 3),
        })
    return params


# ---------------------------------------------------------------------------
# pure-JAX reference (matches PyTorch C3 eval-mode forward)
# ---------------------------------------------------------------------------

def _ref_conv_bn_silu(x, w, b, pad):
    y = lax.conv_general_dilated(
        x, w, window_strides=(1, 1), padding=[(pad, pad), (pad, pad)],
        dimension_numbers=("NCHW", "OIHW", "NCHW"),
        precision=lax.Precision.HIGHEST)
    y = y + b.reshape(1, -1, 1, 1)
    return y * (1.0 / (1.0 + jnp.exp(-y)))


def c3_reference(x, params, shortcut=True):
    a = _ref_conv_bn_silu(x, params["cv1"]["w"], params["cv1"]["b"], 0)
    b = _ref_conv_bn_silu(x, params["cv2"]["w"], params["cv2"]["b"], 0)
    m = a
    for blk in params["m"]:
        t = _ref_conv_bn_silu(m, blk["cv1"]["w"], blk["cv1"]["b"], 0)
        t = _ref_conv_bn_silu(t, blk["cv2"]["w"], blk["cv2"]["b"], 1)
        m = m + t if shortcut else t
    cat = jnp.concatenate([m, b], axis=1)
    return _ref_conv_bn_silu(cat, params["cv3"]["w"], params["cv3"]["b"], 0)


# ---------------------------------------------------------------------------

if __name__ == "__main__":
    key = jax.random.PRNGKey(0)
    kx, kp = jax.random.split(key)

    N, C1, C2, H, W = 2, 16, 16, 32, 32          # c_ = 8, two Bottlenecks
    x = jax.random.normal(kx, (N, C1, H, W), jnp.float32)
    params = init_c3_params(kp, C1, C2, n=2, e=0.5)
    ref = jax.block_until_ready(c3_reference(x, params, shortcut=True))

    # 1) f32 path (tight tolerance): exercises the row-tiled + halo 3x3.
    out32 = jax.block_until_ready(
        c3_forward_pallas(x, params, shortcut=True,
                          compute_dtype=jnp.float32))
    assert out32.shape == (N, C2, H, W)
    err32 = float(jnp.max(jnp.abs(out32 - ref)))
    assert jnp.allclose(out32, ref, atol=2e-3, rtol=2e-3), (
        f"f32 mismatch vs reference, max abs err {err32}")

    # 2) bf16 fast path (bf16 operands + bf16 intermediates, approx recip).
    outbf = jax.block_until_ready(
        c3_forward_pallas(x, params, shortcut=True,
                          compute_dtype=jnp.bfloat16))
    errbf = float(jnp.max(jnp.abs(outbf - ref)))
    assert jnp.allclose(outbf, ref, atol=0.12, rtol=0.06), (
        f"bf16 mismatch vs reference, max abs err {errbf}")

    # 3) tiny forced VMEM budget: exercises the 1x1 cdiv boundary tile
    #    (S % tile != 0) and a 3-row-tile 3x3 (interior halo tiles).
    H2, W2 = 24, 24
    x2 = jax.random.normal(jax.random.PRNGKey(1), (1, C1, H2, W2), jnp.float32)
    out2 = jax.block_until_ready(
        c3_forward_pallas(x2, params, shortcut=True,
                          compute_dtype=jnp.float32,
                          vmem_budget_bytes=96 * 1024))
    ref2 = c3_reference(x2, params, shortcut=True)
    err2 = float(jnp.max(jnp.abs(out2 - ref2)))
    assert jnp.allclose(out2, ref2, atol=2e-3, rtol=2e-3), (
        f"tiled-boundary mismatch vs reference, max abs err {err2}")

    print("KERNEL_OK")
</pallas_src>

<mosaic_0001>
module attributes {stable_mosaic.version = 11 : i64} {
  func.func @kernel(%arg0: i32, %arg1: i32, %arg2: memref<1x16x1024xf32, #tpu.memory_space<vmem>>, %arg3: memref<8x16xf32, #tpu.memory_space<vmem>>, %arg4: memref<8x1xf32, #tpu.memory_space<vmem>>, %arg5: memref<8x16xf32, #tpu.memory_space<vmem>>, %arg6: memref<8x1xf32, #tpu.memory_space<vmem>>, %arg7: memref<1x8x1024xf32, #tpu.memory_space<vmem>>, %arg8: memref<1x8x1024xf32, #tpu.memory_space<vmem>>) attributes {dimension_semantics = [#tpu.dimension_semantics<parallel>, #tpu.dimension_semantics<parallel>], iteration_bounds = array<i64: 2, 1>, scalar_prefetch = 0 : i64, scratch_operands = 0 : i64, tpu.core_type = #tpu.core_type<tc>, window_params = [{transform_indices = @transform_0, window_bounds = array<i64: 1, 16, 1024>}, {pipeline_mode = #tpu.pipeline_mode<synchronous>, transform_indices = @transform_1, window_bounds = array<i64: 8, 16>}, {pipeline_mode = #tpu.pipeline_mode<synchronous>, transform_indices = @transform_2, window_bounds = array<i64: 8, 1>}, {pipeline_mode = #tpu.pipeline_mode<synchronous>, transform_indices = @transform_3, window_bounds = array<i64: 8, 16>}, {pipeline_mode = #tpu.pipeline_mode<synchronous>, transform_indices = @transform_4, window_bounds = array<i64: 8, 1>}, {transform_indices = @transform_5, window_bounds = array<i64: 1, 8, 1024>}, {transform_indices = @transform_6, window_bounds = array<i64: 1, 8, 1024>}]} {
    %c0 = arith.constant 0 : index
    %c0_0 = arith.constant 0 : index
    %c0_1 = arith.constant 0 : index
    %0 = vector.load %arg2[%c0, %c0_0, %c0_1] : memref<1x16x1024xf32, #tpu.memory_space<vmem>>, vector<1x16x1024xf32>
    %1 = vector.shape_cast %0 : vector<1x16x1024xf32> to vector<16x1024xf32>
    %c0_2 = arith.constant 0 : index
    %c0_3 = arith.constant 0 : index
    %2 = vector.load %arg3[%c0_2, %c0_3] : memref<8x16xf32, #tpu.memory_space<vmem>>, vector<8x16xf32>
    %cst = arith.constant dense<0.000000e+00> : vector<8x1024xf32>
    %3 = tpu.matmul %2, %1, %cst {dimension_numbers = #tpu.dot_dimension_numbers<[1], [0], [0], [1], [0, 0, 1, 1], [], []>} : vector<8x16xf32>, vector<16x1024xf32>, vector<8x1024xf32> -> vector<8x1024xf32>
    %c0_4 = arith.constant 0 : index
    %c0_5 = arith.constant 0 : index
    %4 = vector.load %arg4[%c0_4, %c0_5] : memref<8x1xf32, #tpu.memory_space<vmem>>, vector<8x1xf32>
    %5 = vector.broadcast %4 : vector<8x1xf32> to vector<8x1024xf32>
    %6 = arith.addf %3, %5 : vector<8x1024xf32>
    %cst_6 = arith.constant 0.000000e+00 : f32
    %7 = vector.broadcast %cst_6 : f32 to vector<8x1024xf32>
    %8 = arith.subf %7, %6 : vector<8x1024xf32>
    %9 = math.exp %8 : vector<8x1024xf32>
    %cst_7 = arith.constant 1.000000e+00 : f32
    %10 = vector.broadcast %cst_7 : f32 to vector<8x1024xf32>
    %11 = arith.addf %10, %9 : vector<8x1024xf32>
    %12 = tpu.reciprocal %11 : vector<8x1024xf32> -> vector<8x1024xf32>
    %13 = arith.mulf %6, %12 : vector<8x1024xf32>
    %c0_8 = arith.constant 0 : index
    %c0_9 = arith.constant 0 : index
    %c0_10 = arith.constant 0 : index
    %14 = vector.load %arg7[%c0_8, %c0_9, %c0_10] : memref<1x8x1024xf32, #tpu.memory_space<vmem>>, vector<1x8x1024xf32>
    %15 = vector.shape_cast %14 : vector<1x8x1024xf32> to vector<8x1024xf32>
    %16 = vector.shape_cast %13 : vector<8x1024xf32> to vector<1x8x1024xf32>
    tpu.vector_store %arg7[%c0_8, %c0_9, %c0_10], %16 {strides = array<i32>} : memref<1x8x1024xf32, #tpu.memory_space<vmem>>, vector<1x8x1024xf32>,
    %c0_11 = arith.constant 0 : index
    %c0_12 = arith.constant 0 : index
    %17 = vector.load %arg5[%c0_11, %c0_12] : memref<8x16xf32, #tpu.memory_space<vmem>>, vector<8x16xf32>
    %cst_13 = arith.constant dense<0.000000e+00> : vector<8x1024xf32>
    %18 = tpu.matmul %17, %1, %cst_13 {dimension_numbers = #tpu.dot_dimension_numbers<[1], [0], [0], [1], [0, 0, 1, 1], [], []>} : vector<8x16xf32>, vector<16x1024xf32>, vector<8x1024xf32> -> vector<8x1024xf32>
    %c0_14 = arith.constant 0 : index
    %c0_15 = arith.constant 0 : index
    %19 = vector.load %arg6[%c0_14, %c0_15] : memref<8x1xf32, #tpu.memory_space<vmem>>, vector<8x1xf32>
    %20 = vector.broadcast %19 : vector<8x1xf32> to vector<8x1024xf32>
    %21 = arith.addf %18, %20 : vector<8x1024xf32>
    %cst_16 = arith.constant 0.000000e+00 : f32
    %22 = vector.broadcast %cst_16 : f32 to vector<8x1024xf32>
    %23 = arith.subf %22, %21 : vector<8x1024xf32>
    %24 = math.exp %23 : vector<8x1024xf32>
    %cst_17 = arith.constant 1.000000e+00 : f32
    %25 = vector.broadcast %cst_17 : f32 to vector<8x1024xf32>
    %26 = arith.addf %25, %24 : vector<8x1024xf32>
    %27 = tpu.reciprocal %26 : vector<8x1024xf32> -> vector<8x1024xf32>
    %28 = arith.mulf %21, %27 : vector<8x1024xf32>
    %c0_18 = arith.constant 0 : index
    %c0_19 = arith.constant 0 : index
    %c0_20 = arith.constant 0 : index
    %29 = vector.load %arg8[%c0_18, %c0_19, %c0_20] : memref<1x8x1024xf32, #tpu.memory_space<vmem>>, vector<1x8x1024xf32>
    %30 = vector.shape_cast %29 : vector<1x8x1024xf32> to vector<8x1024xf32>
    %31 = vector.shape_cast %28 : vector<8x1024xf32> to vector<1x8x1024xf32>
    tpu.vector_store %arg8[%c0_18, %c0_19, %c0_20], %31 {strides = array<i32>} : memref<1x8x1024xf32, #tpu.memory_space<vmem>>, vector<1x8x1024xf32>,
    return
  }
  func.func @transform_0(%arg0: i32, %arg1: i32) -> (i32, i32, i32) {
    %c0_i32 = arith.constant 0 : i32
    %c0_i32_0 = arith.constant 0 : i32
    return %arg0, %c0_i32, %arg1 : i32, i32, i32
  }
  func.func @transform_1(%arg0: i32, %arg1: i32) -> (i32, i32) {
    %c0_i32 = arith.constant 0 : i32
    %c0_i32_0 = arith.constant 0 : i32
    %c0_i32_1 = arith.constant 0 : i32
    return %c0_i32, %c0_i32_0 : i32, i32
  }
  func.func @transform_2(%arg0: i32, %arg1: i32) -> (i32, i32) {
    %c0_i32 = arith.constant 0 : i32
    %c0_i32_0 = arith.constant 0 : i32
    %c0_i32_1 = arith.constant 0 : i32
    return %c0_i32, %c0_i32_0 : i32, i32
  }
  func.func @transform_3(%arg0: i32, %arg1: i32) -> (i32, i32) {
    %c0_i32 = arith.constant 0 : i32
    %c0_i32_0 = arith.constant 0 : i32
    %c0_i32_1 = arith.constant 0 : i32
    return %c0_i32, %c0_i32_0 : i32, i32
  }
  func.func @transform_4(%arg0: i32, %arg1: i32) -> (i32, i32) {
    %c0_i32 = arith.constant 0 : i32
    %c0_i32_0 = arith.constant 0 : i32
    %c0_i32_1 = arith.constant 0 : i32
    return %c0_i32, %c0_i32_0 : i32, i32
  }
  func.func @transform_5(%arg0: i32, %arg1: i32) -> (i32, i32, i32) {
    %c0_i32 = arith.constant 0 : i32
    %c0_i32_0 = arith.constant 0 : i32
    return %arg0, %c0_i32, %arg1 : i32, i32, i32
  }
  func.func @transform_6(%arg0: i32, %arg1: i32) -> (i32, i32, i32) {
    %c0_i32 = arith.constant 0 : i32
    %c0_i32_0 = arith.constant 0 : i32
    return %arg0, %c0_i32, %arg1 : i32, i32, i32
  }
}

</mosaic_0001>

<llo_original>
// kernel: tpu_custom_call.1
$region0: #{tpu_custom_call.1}
  #allocation0 [shape = 'u32[]', space=smem, size = 0x4, offset = 0x4, fixed_abs, tag = 'smem constant byte address 0x4 - core index']
  #allocation1 [shape = 'u32[144,128]{1,0:T(1,128)}', space=vmem, size = 0x12000, scoped, tag = 'internal scratch']
  %s0 = inlined_call_operand.hbm [shape: f32[2,16,1024], index: 0, kind: input, shape index: {}]
  %s1 = inlined_call_operand.vmem [shape: f32[8,16], index: 1, kind: input, shape index: {}]
  %s2 = inlined_call_operand.vmem [shape: f32[8,1], index: 2, kind: input, shape index: {}]
  %s3 = inlined_call_operand.vmem [shape: f32[8,16], index: 3, kind: input, shape index: {}]
  %s4 = inlined_call_operand.vmem [shape: f32[8,1], index: 4, kind: input, shape index: {}]
  %s5 = inlined_call_operand.hbm [shape: f32[2,8,1024], index: 5, kind: output, shape index: {0}]
  %s6 = inlined_call_operand.hbm [shape: f32[2,8,1024], index: 6, kind: output, shape index: {1}]
  %7 = xla_tuple %s5, %s6
  %s8 = sld [smem:[#allocation0]]
  $region65: #{tpu_custom_call.1} parent=0
    _
  %s10 = ssub.s32 1, %s8
  %s11 = scalar_select 0, %s10, %s8
  $region1: #{tpu_custom_call.1} parent=0
    #allocation2 [shape = 'u8[131072]{0}', space=vmem, size = 0x20000, scoped, tag = 'input window, operand 0']
    #allocation3 [shape = 's32[2]{0}', space=sflag, size = 0x8, scoped, tag = 'scoped memory for tpu_custom_call.1']
    #allocation4 [shape = 's32[2]{0}', space=sflag, size = 0x8, scoped, tag = 'scoped memory for tpu_custom_call.1']
    #allocation5 [shape = 'u8[65536]{0}', space=vmem, size = 0x10000, scoped, tag = 'output window, operand 0']
    #allocation6 [shape = 'u8[65536]{0}', space=vmem, size = 0x10000, scoped, tag = 'output window, operand 1']
    #allocation7 [shape = 's32[2]{0}', space=sflag, size = 0x8, scoped, tag = 'scoped memory for tpu_custom_call.1']
    %12 = vsyncpa [#allocation3], 0
    %s13 = scalar_lea.sflag [#allocation3], 1
    %14 = vsyncpa %s13, 0
    %15 = vsyncpa [#allocation4], 0
    %s16 = scalar_lea.sflag [#allocation4], 1
    %17 = vsyncpa %s16, 0
    %18 = vsyncpa [#allocation7], 0
    %s19 = scalar_lea.sflag [#allocation7], 1
    %20 = vsyncpa %s19, 0
    loop: start=0, step=1, limit=4
    $region2: #{tpu_custom_call.1} parent=1 // loop_pre_header
      _
    $region3: #{tpu_custom_call.1} parent=1 // loop_header
      %s22 = sphi 0, %s26
      %p23 = scmp.ge.s32.totalorder %s22, 4
      %s29 = sphi 0, %s41
      %s30 = sphi 0, %s37
      %s31 = sphi 0, %s29
      %s32 = sphi 0, %s30
      %s33 = sphi 0, %s31
      %s34 = sphi 0, %s32
      %s46 = sphi 0, %s48
      %s49 = sphi 0, %s46
      %s50 = sphi 0, %s49
      %s66 = sphi 0, %s50
      %s70 = sphi 0, %s70
      %s72 = sphi 0, %s70
      %s73 = sphi 0, %s72
      %s87 = sphi 0, %s73
      %s91 = sphi 0, %s91
      %s93 = sphi 0, %s91
      %s94 = sphi 0, %s93
      %s108 = sphi 0, %s94
      %s112 = sphi 0, %s112
      %s114 = sphi 0, %s112
      %s115 = sphi 0, %s114
      %s129 = sphi 0, %s115
      %s133 = sphi 0, %s133
      %s135 = sphi 0, %s133
      %s136 = sphi 0, %s135
      %s150 = sphi 0, %s136
      %s158 = sphi 0, %s160
      %s161 = sphi 0, %s158
      %s162 = sphi 0, %s161
      %s178 = sphi 0, %s162
      %s186 = sphi 0, %s188
      %s189 = sphi 0, %s186
      %s190 = sphi 0, %s189
      %s206 = sphi 0, %s190
    $region4: #{tpu_custom_call.1} parent=1 // loop_header_branch
      %25 = sbr.rel (%p23) target = $region8
    $region5: #{tpu_custom_call.1} parent=1 // loop_body
      %s27 = ssub.s32 %s22, 1
      %s28 = ssub.s32 %s22, 2
      %s35 = sadd.s32 1, %s30
      %p36 = scmp.ge.s32.totalorder %s35, 1
      %s37 = scalar_select %p36, 0, %s35
      %s38 = sadd.s32 1, %s29
      %s39 = scalar_select %p36, %s38, %s29
      %p40 = scmp.ge.s32.totalorder %s39, 2
      %s41 = scalar_select %p40, 0, %s39
      %s42 = ssub.s32 %s29, %s41
      %s43 = ssub.s32 %s30, %s37
      %s44 = sor.u32 %s42, %s43
      %p45 = scmp.eq.s32.totalorder %s44, 0
      %s47 = sadd.s32 %s46, 1
      %s48 = scalar_select %p45, %s46, %s47
      %p51 = pneg %p45
      %p52 = scmp.eq.s32.totalorder %s22, 1
      %p53 = por %p51, %p52
      %p54 = scmp.ne.s32.totalorder %s46, %s49
      %p55 = scmp.eq.s32.totalorder %s22, 0
      %p56 = por %p54, %p55
      %p57 = scmp.ne.s32.totalorder %s46, %s49
      %p58 = scmp.eq.s32.totalorder %s27, 1
      %p59 = por %p57, %p58
      %p60 = scmp.ne.s32.totalorder %s49, %s50
      %p61 = scmp.eq.s32.totalorder %s27, 0
      %p62 = por %p60, %p61
      %p63 = scmp.ne.s32.totalorder %s49, %s50
      %p64 = scmp.eq.s32.totalorder %s28, 1
      %p65 = por %p63, %p64
      %p67 = scmp.ne.s32.totalorder %s50, %s66
      %p68 = scmp.eq.s32.totalorder %s28, 0
      %p69 = por %p67, %p68
      %s71 = sadd.s32 %s70, 1
      %p74 = scmp.eq.s32.totalorder %s22, 1
      %p75 = scmp.ne.s32.totalorder %s70, %s72
      %p76 = scmp.eq.s32.totalorder %s22, 0
      %p77 = por %p75, %p76
      %p78 = scmp.ne.s32.totalorder %s70, %s72
      %p79 = scmp.eq.s32.totalorder %s27, 1
      %p80 = por %p78, %p79
      %p81 = scmp.ne.s32.totalorder %s72, %s73
      %p82 = scmp.eq.s32.totalorder %s27, 0
      %p83 = por %p81, %p82
      %p84 = scmp.ne.s32.totalorder %s72, %s73
      %p85 = scmp.eq.s32.totalorder %s28, 1
      %p86 = por %p84, %p85
      %p88 = scmp.ne.s32.totalorder %s73, %s87
      %p89 = scmp.eq.s32.totalorder %s28, 0
      %p90 = por %p88, %p89
      %s92 = sadd.s32 %s91, 1
      %p95 = scmp.eq.s32.totalorder %s22, 1
      %p96 = scmp.ne.s32.totalorder %s91, %s93
      %p97 = scmp.eq.s32.totalorder %s22, 0
      %p98 = por %p96, %p97
      %p99 = scmp.ne.s32.totalorder %s91, %s93
      %p100 = scmp.eq.s32.totalorder %s27, 1
      %p101 = por %p99, %p100
      %p102 = scmp.ne.s32.totalorder %s93, %s94
      %p103 = scmp.eq.s32.totalorder %s27, 0
      %p104 = por %p102, %p103
      %p105 = scmp.ne.s32.totalorder %s93, %s94
      %p106 = scmp.eq.s32.totalorder %s28, 1
      %p107 = por %p105, %p106
      %p109 = scmp.ne.s32.totalorder %s94, %s108
      %p110 = scmp.eq.s32.totalorder %s28, 0
      %p111 = por %p109, %p110
      %s113 = sadd.s32 %s112, 1
      %p116 = scmp.eq.s32.totalorder %s22, 1
      %p117 = scmp.ne.s32.totalorder %s112, %s114
      %p118 = scmp.eq.s32.totalorder %s22, 0
      %p119 = por %p117, %p118
      %p120 = scmp.ne.s32.totalorder %s112, %s114
      %p121 = scmp.eq.s32.totalorder %s27, 1
      %p122 = por %p120, %p121
      %p123 = scmp.ne.s32.totalorder %s114, %s115
      %p124 = scmp.eq.s32.totalorder %s27, 0
      %p125 = por %p123, %p124
      %p126 = scmp.ne.s32.totalorder %s114, %s115
      %p127 = scmp.eq.s32.totalorder %s28, 1
      %p128 = por %p126, %p127
      %p130 = scmp.ne.s32.totalorder %s115, %s129
      %p131 = scmp.eq.s32.totalorder %s28, 0
      %p132 = por %p130, %p131
      %s134 = sadd.s32 %s133, 1
      %p137 = scmp.eq.s32.totalorder %s22, 1
      %p138 = scmp.ne.s32.totalorder %s133, %s135
      %p139 = scmp.eq.s32.totalorder %s22, 0
      %p140 = por %p138, %p139
      %p141 = scmp.ne.s32.totalorder %s133, %s135
      %p142 = scmp.eq.s32.totalorder %s27, 1
      %p143 = por %p141, %p142
      %p144 = scmp.ne.s32.totalorder %s135, %s136
      %p145 = scmp.eq.s32.totalorder %s27, 0
      %p146 = por %p144, %p145
      %p147 = scmp.ne.s32.totalorder %s135, %s136
      %p148 = scmp.eq.s32.totalorder %s28, 1
      %p149 = por %p147, %p148
      %p151 = scmp.ne.s32.totalorder %s136, %s150
      %p152 = scmp.eq.s32.totalorder %s28, 0
      %p153 = por %p151, %p152
      %s154 = ssub.s32 %s29, %s41
      %s155 = ssub.s32 %s30, %s37
      %s156 = sor.u32 %s154, %s155
      %p157 = scmp.eq.s32.totalorder %s156, 0
      %s159 = sadd.s32 %s158, 1
      %s160 = scalar_select %p157, %s158, %s159
      %p163 = pneg %p157
      %p164 = scmp.eq.s32.totalorder %s22, 1
      %p165 = por %p163, %p164
      %p166 = scmp.ne.s32.totalorder %s158, %s161
      %p167 = scmp.eq.s32.totalorder %s22, 0
      %p168 = por %p166, %p167
      %p169 = scmp.ne.s32.totalorder %s158, %s161
      %p170 = scmp.eq.s32.totalorder %s27, 1
      %p171 = por %p169, %p170
      %p172 = scmp.ne.s32.totalorder %s161, %s162
      %p173 = scmp.eq.s32.totalorder %s27, 0
      %p174 = por %p172, %p173
      %p175 = scmp.ne.s32.totalorder %s161, %s162
      %p176 = scmp.eq.s32.totalorder %s28, 1
      %p177 = por %p175, %p176
      %p179 = scmp.ne.s32.totalorder %s162, %s178
      %p180 = scmp.eq.s32.totalorder %s28, 0
      %p181 = por %p179, %p180
      %s182 = ssub.s32 %s29, %s41
      %s183 = ssub.s32 %s30, %s37
      %s184 = sor.u32 %s182, %s183
      %p185 = scmp.eq.s32.totalorder %s184, 0
      %s187 = sadd.s32 %s186, 1
      %s188 = scalar_select %p185, %s186, %s187
      %p191 = pneg %p185
      %p192 = scmp.eq.s32.totalorder %s22, 1
      %p193 = por %p191, %p192
      %p194 = scmp.ne.s32.totalorder %s186, %s189
      %p195 = scmp.eq.s32.totalorder %s22, 0
      %p196 = por %p194, %p195
      %p197 = scmp.ne.s32.totalorder %s186, %s189
      %p198 = scmp.eq.s32.totalorder %s27, 1
      %p199 = por %p197, %p198
      %p200 = scmp.ne.s32.totalorder %s189, %s190
      %p201 = scmp.eq.s32.totalorder %s27, 0
      %p202 = por %p200, %p201
      %p203 = scmp.ne.s32.totalorder %s189, %s190
      %p204 = scmp.eq.s32.totalorder %s28, 1
      %p205 = por %p203, %p204
      %p207 = scmp.ne.s32.totalorder %s190, %s206
      %p208 = scmp.eq.s32.totalorder %s28, 0
      %p209 = por %p207, %p208
      %p210 = scmp.le.s32.totalorder 1, %s22
      %p211 = scmp.lt.s32.totalorder %s22, 3
      %p212 = pnand %p210, %p211
      %p213 = pneg %p212
      // Predicated region
      $region9: #{tpu_custom_call.1} parent=5 // pred_check
        _
      $region10: #{tpu_custom_call.1} parent=5 // pred_check_branch
        %215 = sbr.rel (%p212) target = $region12
      $region11: #{tpu_custom_call.1} parent=5 // pred_region
        %s216 = ssub.s32 %s22, 1
        // Predicated region
        $region13: #{tpu_custom_call.1} parent=11 // pred_check
          %p217 = pneg %p83
        $region14: #{tpu_custom_call.1} parent=11 // pred_check_branch
          %219 = sbr.rel (%p217) target = $region16
        $region15: #{tpu_custom_call.1} parent=11 // pred_region
          _
        $region16: #{tpu_custom_call.1} parent=11 // pred_fallthru
          _
        // Predicated region
        $region17: #{tpu_custom_call.1} parent=11 // pred_check
          %p220 = pneg %p104
        $region18: #{tpu_custom_call.1} parent=11 // pred_check_branch
          %222 = sbr.rel (%p220) target = $region20
        $region19: #{tpu_custom_call.1} parent=11 // pred_region
          _
        $region20: #{tpu_custom_call.1} parent=11 // pred_fallthru
          _
        // Predicated region
        $region21: #{tpu_custom_call.1} parent=11 // pred_check
          %p223 = pneg %p125
        $region22: #{tpu_custom_call.1} parent=11 // pred_check_branch
          %225 = sbr.rel (%p223) target = $region24
        $region23: #{tpu_custom_call.1} parent=11 // pred_region
          _
        $region24: #{tpu_custom_call.1} parent=11 // pred_fallthru
          _
        // Predicated region
        $region25: #{tpu_custom_call.1} parent=11 // pred_check
          %p226 = pneg %p146
        $region26: #{tpu_custom_call.1} parent=11 // pred_check_branch
          %228 = sbr.rel (%p226) target = $region28
        $region27: #{tpu_custom_call.1} parent=11 // pred_region
          _
        $region28: #{tpu_custom_call.1} parent=11 // pred_fallthru
          _
      $region12: #{tpu_custom_call.1} parent=5 // pred_fallthru
        _
      %p229 = scmp.lt.s32.totalorder %s22, 2
      // Predicated region
      $region29: #{tpu_custom_call.1} parent=5 // pred_check
        %p230 = pneg %p229
      $region30: #{tpu_custom_call.1} parent=5 // pred_check_branch
        %232 = sbr.rel (%p230) target = $region32
      $region31: #{tpu_custom_call.1} parent=5 // pred_region
        // Predicated region
        $region33: #{tpu_custom_call.1} parent=31 // pred_check
          %p233 = pneg %p56
        $region34: #{tpu_custom_call.1} parent=31 // pred_check_branch
          %235 = sbr.rel (%p233) target = $region36
        $region35: #{tpu_custom_call.1} parent=31 // pred_region
          %s236 = sand.u32 %s46, 1
          %s237 = scalar_lea.sflag [#allocation3], %s236
          %s238 = sand.u32 %s46, 1
          %s239 = smul.addr %s238, 128
          %s240 = scalar_lea.vmem [#allocation2], %s239
          %s241 = smul.u32 8, %s30
          %s243 = ssub.s32 2048, 2048
          %244 = vsyncadd %s237, %s243
          %s245 = smul.addr %s29, 16
          %s246 = sadd.s32 %s241, %s245
          %s247 = smul.addr %s246, 128
          %s248 = scalar_lea.hbm %s0, %s247
          %s249 = sshll.u32 %s240, 4
          %s250 = int_to_ptr.vmem [resolvable:$true] %s249
          %255 = dma.hbm_to_vmem [thread:$0]  %s248, 2048, %s250, %s237, 1024, 1024, 64
        $region36: #{tpu_custom_call.1} parent=31 // pred_fallthru
          _
      $region32: #{tpu_custom_call.1} parent=5 // pred_fallthru
        _
      %p256 = scmp.le.s32.totalorder 1, %s22
      %p257 = scmp.lt.s32.totalorder %s22, 3
      %p258 = pnand %p256, %p257
      %p259 = pneg %p258
      // Predicated region
      $region37: #{tpu_custom_call.1} parent=5 // pred_check
        _
      $region38: #{tpu_custom_call.1} parent=5 // pred_check_branch
        %261 = sbr.rel (%p258) target = $region40
      $region39: #{tpu_custom_call.1} parent=5 // pred_region
        %s262 = ssub.s32 %s22, 1
        %s263 = sand.u32 %s49, 1
        %s264 = scalar_lea.sflag [#allocation3], %s263
        %s265 = sand.u32 %s49, 1
        %s266 = smul.addr %s265, 128
        %s267 = scalar_lea.vmem [#allocation2], %s266
        // Predicated region
        $region41: #{tpu_custom_call.1} parent=39 // pred_check
          %p268 = pneg %p62
        $region42: #{tpu_custom_call.1} parent=39 // pred_check_branch
          %270 = sbr.rel (%p268) target = $region44
        $region43: #{tpu_custom_call.1} parent=39 // pred_region
          %271 = dma.done %s264, 2048
        $region44: #{tpu_custom_call.1} parent=39 // pred_fallthru
          _
        %s272 = sand.u32 %s49, 1
        %s273 = scalar_lea.sflag [#allocation3], %s272
        %s274 = sand.u32 %s49, 1
        %s275 = smul.addr %s274, 128
        %s276 = scalar_lea.vmem [#allocation2], %s275
        %p277 = pneg %p62
        %p278 = pneg %p59
        %p279 = pneg %p83
        %p280 = pneg %p80
        %p281 = pneg %p104
        %p282 = pneg %p101
        %p283 = pneg %p125
        %p284 = pneg %p122
        %p285 = pneg %p146
        %p286 = pneg %p143
        %p287 = pneg %p174
        %p288 = pneg %p171
        %s289 = sand.u32 %s161, 1
        %s290 = scalar_lea.sflag [#allocation4], %s289
        %s291 = sand.u32 %s161, 1
        %s292 = smul.addr %s291, 64
        %s293 = scalar_lea.vmem [#allocation5], %s292
        %p294 = pneg %p202
        %p295 = pneg %p199
        %s296 = sand.u32 %s189, 1
        %s297 = scalar_lea.sflag [#allocation7], %s296
        %s298 = sand.u32 %s189, 1
        %s299 = smul.addr %s298, 64
        %s300 = scalar_lea.vmem [#allocation6], %s299
        %s301 = smul.u32 8, %s32
        %s302 = smul.u32 8, %s32
        %s303 = smul.u32 8, %s32
        %v304 = vld [vmem:[%s267] sm:$0xff]
        %v305 = vld [vmem:[%s267 + $0x8] sm:$0xff]
        %v306 = vld [vmem:[%s267 + $0x10] sm:$0xff]
        %v307 = vld [vmem:[%s267 + $0x18] sm:$0xff]
        %v308 = vld [vmem:[%s267 + $0x20] sm:$0xff]
        %v309 = vld [vmem:[%s267 + $0x28] sm:$0xff]
        %v310 = vld [vmem:[%s267 + $0x30] sm:$0xff]
        %v311 = vld [vmem:[%s267 + $0x38] sm:$0xff]
        %v312 = vld [vmem:[%s267 + $0x40] sm:$0xff]
        %v313 = vld [vmem:[%s267 + $0x48] sm:$0xff]
        %v314 = vld [vmem:[%s267 + $0x50] sm:$0xff]
        %v315 = vld [vmem:[%s267 + $0x58] sm:$0xff]
        %v316 = vld [vmem:[%s267 + $0x60] sm:$0xff]
        %v317 = vld [vmem:[%s267 + $0x68] sm:$0xff]
        %v318 = vld [vmem:[%s267 + $0x70] sm:$0xff]
        %v319 = vld [vmem:[%s267 + $0x78] sm:$0xff]
        %v320 = vld [vmem:[%s1] sm:$0xff]
        %v321 = vld [vmem:[%s2] sm:$0xff]
        %323 = vset.pattern.permute.xlu0 0
        %324 = vperm.xlu0 %323, %v321
        %v325 = vpop.permute.xlu0 %324
        %vm327 = vcmask 130048
        %v329 = vsel %vm327, %v320, 0
        %331 = vmatprep.subr.mxu0 0.0
        %332 = vmatpush1.msra.mxu0 0.0
        %333 = vmatprep.subr.mxu0 0.0
        %334 = vmatpush1.msra.mxu0 0.0
        %335 = vmatprep.subr.mxu0 0.0
        %336 = vmatpush1.msra.mxu0 0.0
        %337 = vmatprep.subr.mxu0 0.0
        %338 = vmatpush1.msra.mxu0 0.0
        %339 = vmatprep.subr.mxu0 0.0
        %340 = vmatpush1.msra.mxu0 0.0
        %341 = vmatprep.subr.mxu0 0.0
        %342 = vmatpush1.msra.mxu0 0.0
        %343 = vmatprep.subr.mxu0 0.0
        %344 = vmatpush1.msra.mxu0 0.0
        %345 = vmatprep.subr.mxu0 0.0
        %346 = vmatpush1.msra.mxu0 0.0
        %347 = vmatprep.subr.mxu0 0.0
        %348 = vmatpush1.msra.mxu0 0.0
        %349 = vmatprep.subr.mxu0 0.0
        %350 = vmatpush1.msra.mxu0 0.0
        %351 = vmatprep.subr.mxu0 0.0
        %352 = vmatpush1.msra.mxu0 0.0
        %353 = vmatprep.subr.mxu0 0.0
        %354 = vmatpush1.msra.mxu0 0.0
        %355 = vmatprep.subr.mxu0 0.0
        %356 = vmatpush1.msra.mxu0 0.0
        %357 = vmatprep.subr.mxu0 0.0
        %358 = vmatpush1.msra.mxu0 0.0
        %359 = vmatprep.subr.mxu0 %v313
        %360 = vmatpush1.msra.mxu0 %v312
        %361 = vmatprep.subr.mxu0 %v305
        %362 = vmatpush1.msra.mxu0 %v304
        %363 = vmatprep.subr.mxu0 0.0
        %364 = vmatpush2.msra.mxu0 0.0
        %365 = vmatprep.subr.mxu0 0.0
        %366 = vmatpush2.msra.mxu0 0.0
        %367 = vmatprep.subr.mxu0 0.0
        %368 = vmatpush2.msra.mxu0 0.0
        %369 = vmatprep.subr.mxu0 0.0
        %370 = vmatpush2.msra.mxu0 0.0
        %371 = vmatprep.subr.mxu0 0.0
        %372 = vmatpush2.msra.mxu0 0.0
        %373 = vmatprep.subr.mxu0 0.0
        %374 = vmatpush2.msra.mxu0 0.0
        %375 = vmatprep.subr.mxu0 0.0
        %376 = vmatpush2.msra.mxu0 0.0
        %377 = vmatprep.subr.mxu0 0.0
        %378 = vmatpush2.msra.mxu0 0.0
        %379 = vmatprep.subr.mxu0 0.0
        %380 = vmatpush2.msra.mxu0 0.0
        %381 = vmatprep.subr.mxu0 0.0
        %382 = vmatpush2.msra.mxu0 0.0
        %383 = vmatprep.subr.mxu0 0.0
        %384 = vmatpush2.msra.mxu0 0.0
        %385 = vmatprep.subr.mxu0 0.0
        %386 = vmatpush2.msra.mxu0 0.0
        %387 = vmatprep.subr.mxu0 0.0
        %388 = vmatpush2.msra.mxu0 0.0
        %389 = vmatprep.subr.mxu0 0.0
        %390 = vmatpush2.msra.mxu0 0.0
        %391 = vmatprep.subr.mxu0 0.0
        %392 = vmatpush2.msra.mxu0 0.0
        %393 = vmatprep.subr.mxu0 0.0
        %394 = vmatpush2.msra.mxu0 0.0
        %395 = vmatprep.mubr.f32.mxu0 0.0
        %396 = vmatmul.mubr.f32.gmra.mxu0 %v329
        %v397 = vpop.f32.mrf.mxu0
        %v398 = vadd.f32 %v325, %v397
        %v399 = vpop.f32.mrf.mxu0
        %v400 = vadd.f32 %v325, %v399
        %401 = vdwg.mxu0
        %402 = vmatprep.subr.mxu0 0.0
        %403 = vmatpush1.msra.mxu0 0.0
        %404 = vmatprep.subr.mxu0 0.0
        %405 = vmatpush1.msra.mxu0 0.0
        %406 = vmatprep.subr.mxu0 0.0
        %407 = vmatpush1.msra.mxu0 0.0
        %408 = vmatprep.subr.mxu0 0.0
        %409 = vmatpush1.msra.mxu0 0.0
        %410 = vmatprep.subr.mxu0 0.0
        %411 = vmatpush1.msra.mxu0 0.0
        %412 = vmatprep.subr.mxu0 0.0
        %413 = vmatpush1.msra.mxu0 0.0
        %414 = vmatprep.subr.mxu0 0.0
        %415 = vmatpush1.msra.mxu0 0.0
        %416 = vmatprep.subr.mxu0 0.0
        %417 = vmatpush1.msra.mxu0 0.0
        %418 = vmatprep.subr.mxu0 0.0
        %419 = vmatpush1.msra.mxu0 0.0
        %420 = vmatprep.subr.mxu0 0.0
        %421 = vmatpush1.msra.mxu0 0.0
        %422 = vmatprep.subr.mxu0 0.0
        %423 = vmatpush1.msra.mxu0 0.0
        %424 = vmatprep.subr.mxu0 0.0
        %425 = vmatpush1.msra.mxu0 0.0
        %426 = vmatprep.subr.mxu0 0.0
        %427 = vmatpush1.msra.mxu0 0.0
        %428 = vmatprep.subr.mxu0 0.0
        %429 = vmatpush1.msra.mxu0 0.0
        %430 = vmatprep.subr.mxu0 %v315
        %431 = vmatpush1.msra.mxu0 %v314
        %432 = vmatprep.subr.mxu0 %v307
        %433 = vmatpush1.msra.mxu0 %v306
        %434 = vmatprep.subr.mxu0 0.0
        %435 = vmatpush2.msra.mxu0 0.0
        %436 = vmatprep.subr.mxu0 0.0
        %437 = vmatpush2.msra.mxu0 0.0
        %438 = vmatprep.subr.mxu0 0.0
        %439 = vmatpush2.msra.mxu0 0.0
        %440 = vmatprep.subr.mxu0 0.0
        %441 = vmatpush2.msra.mxu0 0.0
        %442 = vmatprep.subr.mxu0 0.0
        %443 = vmatpush2.msra.mxu0 0.0
        %444 = vmatprep.subr.mxu0 0.0
        %445 = vmatpush2.msra.mxu0 0.0
        %446 = vmatprep.subr.mxu0 0.0
        %447 = vmatpush2.msra.mxu0 0.0
        %448 = vmatprep.subr.mxu0 0.0
        %449 = vmatpush2.msra.mxu0 0.0
        %450 = vmatprep.subr.mxu0 0.0
        %451 = vmatpush2.msra.mxu0 0.0
        %452 = vmatprep.subr.mxu0 0.0
        %453 = vmatpush2.msra.mxu0 0.0
        %454 = vmatprep.subr.mxu0 0.0
        %455 = vmatpush2.msra.mxu0 0.0
        %456 = vmatprep.subr.mxu0 0.0
        %457 = vmatpush2.msra.mxu0 0.0
        %458 = vmatprep.subr.mxu0 0.0
        %459 = vmatpush2.msra.mxu0 0.0
        %460 = vmatprep.subr.mxu0 0.0
        %461 = vmatpush2.msra.mxu0 0.0
        %462 = vmatprep.subr.mxu0 0.0
        %463 = vmatpush2.msra.mxu0 0.0
        %464 = vmatprep.subr.mxu0 0.0
        %465 = vmatpush2.msra.mxu0 0.0
        %466 = vmatprep.mubr.f32.mxu0 0.0
        %467 = vmatmul.mubr.f32.gmra.mxu0 %v329
        %v468 = vpop.f32.mrf.mxu0
        %v469 = vadd.f32 %v325, %v468
        %v470 = vpop.f32.mrf.mxu0
        %v471 = vadd.f32 %v325, %v470
        %472 = vdwg.mxu0
        %473 = vmatprep.subr.mxu0 0.0
        %474 = vmatpush1.msra.mxu0 0.0
        %475 = vmatprep.subr.mxu0 0.0
        %476 = vmatpush1.msra.mxu0 0.0
        %477 = vmatprep.subr.mxu0 0.0
        %478 = vmatpush1.msra.mxu0 0.0
        %479 = vmatprep.subr.mxu0 0.0
        %480 = vmatpush1.msra.mxu0 0.0
        %481 = vmatprep.subr.mxu0 0.0
        %482 = vmatpush1.msra.mxu0 0.0
        %483 = vmatprep.subr.mxu0 0.0
        %484 = vmatpush1.msra.mxu0 0.0
        %485 = vmatprep.subr.mxu0 0.0
        %486 = vmatpush1.msra.mxu0 0.0
        %487 = vmatprep.subr.mxu0 0.0
        %488 = vmatpush1.msra.mxu0 0.0
        %489 = vmatprep.subr.mxu0 0.0
        %490 = vmatpush1.msra.mxu0 0.0
        %491 = vmatprep.subr.mxu0 0.0
        %492 = vmatpush1.msra.mxu0 0.0
        %493 = vmatprep.subr.mxu0 0.0
        %494 = vmatpush1.msra.mxu0 0.0
        %495 = vmatprep.subr.mxu0 0.0
        %496 = vmatpush1.msra.mxu0 0.0
        %497 = vmatprep.subr.mxu0 0.0
        %498 = vmatpush1.msra.mxu0 0.0
        %499 = vmatprep.subr.mxu0 0.0
        %500 = vmatpush1.msra.mxu0 0.0
        %501 = vmatprep.subr.mxu0 %v317
        %502 = vmatpush1.msra.mxu0 %v316
        %503 = vmatprep.subr.mxu0 %v309
        %504 = vmatpush1.msra.mxu0 %v308
        %505 = vmatprep.subr.mxu0 0.0
        %506 = vmatpush2.msra.mxu0 0.0
        %507 = vmatprep.subr.mxu0 0.0
        %508 = vmatpush2.msra.mxu0 0.0
        %509 = vmatprep.subr.mxu0 0.0
        %510 = vmatpush2.msra.mxu0 0.0
        %511 = vmatprep.subr.mxu0 0.0
        %512 = vmatpush2.msra.mxu0 0.0
        %513 = vmatprep.subr.mxu0 0.0
        %514 = vmatpush2.msra.mxu0 0.0
        %515 = vmatprep.subr.mxu0 0.0
        %516 = vmatpush2.msra.mxu0 0.0
        %517 = vmatprep.subr.mxu0 0.0
        %518 = vmatpush2.msra.mxu0 0.0
        %519 = vmatprep.subr.mxu0 0.0
        %520 = vmatpush2.msra.mxu0 0.0
        %521 = vmatprep.subr.mxu0 0.0
        %522 = vmatpush2.msra.mxu0 0.0
        %523 = vmatprep.subr.mxu0 0.0
        %524 = vmatpush2.msra.mxu0 0.0
        %525 = vmatprep.subr.mxu0 0.0
        %526 = vmatpush2.msra.mxu0 0.0
        %527 = vmatprep.subr.mxu0 0.0
        %528 = vmatpush2.msra.mxu0 0.0
        %529 = vmatprep.subr.mxu0 0.0
        %530 = vmatpush2.msra.mxu0 0.0
        %531 = vmatprep.subr.mxu0 0.0
        %532 = vmatpush2.msra.mxu0 0.0
        %533 = vmatprep.subr.mxu0 0.0
        %534 = vmatpush2.msra.mxu0 0.0
        %535 = vmatprep.subr.mxu0 0.0
        %536 = vmatpush2.msra.mxu0 0.0
        %537 = vmatprep.mubr.f32.mxu0 0.0
        %538 = vmatmul.mubr.f32.gmra.mxu0 %v329
        %v539 = vpop.f32.mrf.mxu0
        %v540 = vadd.f32 %v325, %v539
        %v541 = vpop.f32.mrf.mxu0
        %v542 = vadd.f32 %v325, %v541
        %543 = vdwg.mxu0
        %544 = vmatprep.subr.mxu0 0.0
        %545 = vmatpush1.msra.mxu0 0.0
        %546 = vmatprep.subr.mxu0 0.0
        %547 = vmatpush1.msra.mxu0 0.0
        %548 = vmatprep.subr.mxu0 0.0
        %549 = vmatpush1.msra.mxu0 0.0
        %550 = vmatprep.subr.mxu0 0.0
        %551 = vmatpush1.msra.mxu0 0.0
        %552 = vmatprep.subr.mxu0 0.0
        %553 = vmatpush1.msra.mxu0 0.0
        %554 = vmatprep.subr.mxu0 0.0
        %555 = vmatpush1.msra.mxu0 0.0
        %556 = vmatprep.subr.mxu0 0.0
        %557 = vmatpush1.msra.mxu0 0.0
        %558 = vmatprep.subr.mxu0 0.0
        %559 = vmatpush1.msra.mxu0 0.0
        %560 = vmatprep.subr.mxu0 0.0
        %561 = vmatpush1.msra.mxu0 0.0
        %562 = vmatprep.subr.mxu0 0.0
        %563 = vmatpush1.msra.mxu0 0.0
        %564 = vmatprep.subr.mxu0 0.0
        %565 = vmatpush1.msra.mxu0 0.0
        %566 = vmatprep.subr.mxu0 0.0
        %567 = vmatpush1.msra.mxu0 0.0
        %568 = vmatprep.subr.mxu0 0.0
        %569 = vmatpush1.msra.mxu0 0.0
        %570 = vmatprep.subr.mxu0 0.0
        %571 = vmatpush1.msra.mxu0 0.0
        %572 = vmatprep.subr.mxu0 %v319
        %573 = vmatpush1.msra.mxu0 %v318
        %574 = vmatprep.subr.mxu0 %v311
        %575 = vmatpush1.msra.mxu0 %v310
        %576 = vmatprep.subr.mxu0 0.0
        %577 = vmatpush2.msra.mxu0 0.0
        %578 = vmatprep.subr.mxu0 0.0
        %579 = vmatpush2.msra.mxu0 0.0
        %580 = vmatprep.subr.mxu0 0.0
        %581 = vmatpush2.msra.mxu0 0.0
        %582 = vmatprep.subr.mxu0 0.0
        %583 = vmatpush2.msra.mxu0 0.0
        %584 = vmatprep.subr.mxu0 0.0
        %585 = vmatpush2.msra.mxu0 0.0
        %586 = vmatprep.subr.mxu0 0.0
        %587 = vmatpush2.msra.mxu0 0.0
        %588 = vmatprep.subr.mxu0 0.0
        %589 = vmatpush2.msra.mxu0 0.0
        %590 = vmatprep.subr.mxu0 0.0
        %591 = vmatpush2.msra.mxu0 0.0
        %592 = vmatprep.subr.mxu0 0.0
        %593 = vmatpush2.msra.mxu0 0.0
        %594 = vmatprep.subr.mxu0 0.0
        %595 = vmatpush2.msra.mxu0 0.0
        %596 = vmatprep.subr.mxu0 0.0
        %597 = vmatpush2.msra.mxu0 0.0
        %598 = vmatprep.subr.mxu0 0.0
        %599 = vmatpush2.msra.mxu0 0.0
        %600 = vmatprep.subr.mxu0 0.0
        %601 = vmatpush2.msra.mxu0 0.0
        %602 = vmatprep.subr.mxu0 0.0
        %603 = vmatpush2.msra.mxu0 0.0
        %604 = vmatprep.subr.mxu0 0.0
        %605 = vmatpush2.msra.mxu0 0.0
        %606 = vmatprep.subr.mxu0 0.0
        %607 = vmatpush2.msra.mxu0 0.0
        %608 = vmatprep.mubr.f32.mxu0 0.0
        %609 = vmatmul.mubr.f32.gmra.mxu0 %v329
        %v610 = vpop.f32.mrf.mxu0
        %v611 = vadd.f32 %v325, %v610
        %v612 = vpop.f32.mrf.mxu0
        %v613 = vadd.f32 %v325, %v612
        %614 = vdwg.mxu0
        %v615 = vsub.f32 0.0, %v398
        %v616 = vsub.f32 0.0, %v400
        %v617 = vsub.f32 0.0, %v469
        %v618 = vsub.f32 0.0, %v471
        %v619 = vsub.f32 0.0, %v540
        %v620 = vsub.f32 0.0, %v542
        %v621 = vsub.f32 0.0, %v611
        %v622 = vsub.f32 0.0, %v613
        %v623 = vmul.f32 %v615, 1.442695
        %v624 = vpow.pop %v623
        %v625 = vmul.f32 %v616, 1.442695
        %v626 = vpow.pop %v625
        %v627 = vmul.f32 %v617, 1.442695
        %v628 = vpow.pop %v627
        %v629 = vmul.f32 %v618, 1.442695
        %v630 = vpow.pop %v629
        %v631 = vmul.f32 %v619, 1.442695
        %v632 = vpow.pop %v631
        %v633 = vmul.f32 %v620, 1.442695
        %v634 = vpow.pop %v633
        %v635 = vmul.f32 %v621, 1.442695
        %v636 = vpow.pop %v635
        %v637 = vmul.f32 %v622, 1.442695
        %v638 = vpow.pop %v637
        %v639 = vadd.f32 %v624, 1.0
        %v640 = vadd.f32 %v626, 1.0
        %v641 = vadd.f32 %v628, 1.0
        %v642 = vadd.f32 %v630, 1.0
        %v643 = vadd.f32 %v632, 1.0
        %v644 = vadd.f32 %v634, 1.0
        %v645 = vadd.f32 %v636, 1.0
        %v646 = vadd.f32 %v638, 1.0
        %v647 = vrcp.pop %v639
        %v648 = vrcp.pop %v640
        %v649 = vrcp.pop %v641
        %v650 = vrcp.pop %v642
        %v651 = vrcp.pop %v643
        %v652 = vrcp.pop %v644
        %v653 = vrcp.pop %v645
        %v654 = vrcp.pop %v646
        %v655 = vmul.f32 %v398, %v647
        %v656 = vmul.f32 %v400, %v648
        %v657 = vmul.f32 %v469, %v649
        %v658 = vmul.f32 %v471, %v650
        %v659 = vmul.f32 %v540, %v651
        %v660 = vmul.f32 %v542, %v652
        %v661 = vmul.f32 %v611, %v653
        %v662 = vmul.f32 %v613, %v654
        %663 = vst [vmem:[%s293] sm:$0xff] %v655
        %664 = vst [vmem:[%s293 + $0x8] sm:$0xff] %v656
        %665 = vst [vmem:[%s293 + $0x10] sm:$0xff] %v657
        %666 = vst [vmem:[%s293 + $0x18] sm:$0xff] %v658
        %667 = vst [vmem:[%s293 + $0x20] sm:$0xff] %v659
        %668 = vst [vmem:[%s293 + $0x28] sm:$0xff] %v660
        %669 = vst [vmem:[%s293 + $0x30] sm:$0xff] %v661
        %670 = vst [vmem:[%s293 + $0x38] sm:$0xff] %v662
        %v671 = vld [vmem:[%s3] sm:$0xff]
        %v672 = vld [vmem:[%s4] sm:$0xff]
        %674 = vset.pattern.permute.xlu0 0
        %675 = vperm.xlu0 %674, %v672
        %v676 = vpop.permute.xlu0 %675
        %v679 = vsel %vm327, %v671, 0
        %681 = vmatprep.subr.mxu0 0.0
        %682 = vmatpush1.msra.mxu0 0.0
        %683 = vmatprep.subr.mxu0 0.0
        %684 = vmatpush1.msra.mxu0 0.0
        %685 = vmatprep.subr.mxu0 0.0
        %686 = vmatpush1.msra.mxu0 0.0
        %687 = vmatprep.subr.mxu0 0.0
        %688 = vmatpush1.msra.mxu0 0.0
        %689 = vmatprep.subr.mxu0 0.0
        %690 = vmatpush1.msra.mxu0 0.0
        %691 = vmatprep.subr.mxu0 0.0
        %692 = vmatpush1.msra.mxu0 0.0
        %693 = vmatprep.subr.mxu0 0.0
        %694 = vmatpush1.msra.mxu0 0.0
        %695 = vmatprep.subr.mxu0 0.0
        %696 = vmatpush1.msra.mxu0 0.0
        %697 = vmatprep.subr.mxu0 0.0
        %698 = vmatpush1.msra.mxu0 0.0
        %699 = vmatprep.subr.mxu0 0.0
        %700 = vmatpush1.msra.mxu0 0.0
        %701 = vmatprep.subr.mxu0 0.0
        %702 = vmatpush1.msra.mxu0 0.0
        %703 = vmatprep.subr.mxu0 0.0
        %704 = vmatpush1.msra.mxu0 0.0
        %705 = vmatprep.subr.mxu0 0.0
        %706 = vmatpush1.msra.mxu0 0.0
        %707 = vmatprep.subr.mxu0 0.0
        %708 = vmatpush1.msra.mxu0 0.0
        %709 = vmatprep.subr.mxu0 %v313
        %710 = vmatpush1.msra.mxu0 %v312
        %711 = vmatprep.subr.mxu0 %v305
        %712 = vmatpush1.msra.mxu0 %v304
        %713 = vmatprep.subr.mxu0 0.0
        %714 = vmatpush2.msra.mxu0 0.0
        %715 = vmatprep.subr.mxu0 0.0
        %716 = vmatpush2.msra.mxu0 0.0
        %717 = vmatprep.subr.mxu0 0.0
        %718 = vmatpush2.msra.mxu0 0.0
        %719 = vmatprep.subr.mxu0 0.0
        %720 = vmatpush2.msra.mxu0 0.0
        %721 = vmatprep.subr.mxu0 0.0
        %722 = vmatpush2.msra.mxu0 0.0
        %723 = vmatprep.subr.mxu0 0.0
        %724 = vmatpush2.msra.mxu0 0.0
        %725 = vmatprep.subr.mxu0 0.0
        %726 = vmatpush2.msra.mxu0 0.0
        %727 = vmatprep.subr.mxu0 0.0
        %728 = vmatpush2.msra.mxu0 0.0
        %729 = vmatprep.subr.mxu0 0.0
        %730 = vmatpush2.msra.mxu0 0.0
        %731 = vmatprep.subr.mxu0 0.0
        %732 = vmatpush2.msra.mxu0 0.0
        %733 = vmatprep.subr.mxu0 0.0
        %734 = vmatpush2.msra.mxu0 0.0
        %735 = vmatprep.subr.mxu0 0.0
        %736 = vmatpush2.msra.mxu0 0.0
        %737 = vmatprep.subr.mxu0 0.0
        %738 = vmatpush2.msra.mxu0 0.0
        %739 = vmatprep.subr.mxu0 0.0
        %740 = vmatpush2.msra.mxu0 0.0
        %741 = vmatprep.subr.mxu0 0.0
        %742 = vmatpush2.msra.mxu0 0.0
        %743 = vmatprep.subr.mxu0 0.0
        %744 = vmatpush2.msra.mxu0 0.0
        %745 = vmatprep.mubr.f32.mxu0 0.0
        %746 = vmatmul.mubr.f32.gmra.mxu0 %v679
        %v747 = vpop.f32.mrf.mxu0
        %v748 = vadd.f32 %v676, %v747
        %v749 = vpop.f32.mrf.mxu0
        %v750 = vadd.f32 %v676, %v749
        %751 = vdwg.mxu0
        %752 = vmatprep.subr.mxu0 0.0
        %753 = vmatpush1.msra.mxu0 0.0
        %754 = vmatprep.subr.mxu0 0.0
        %755 = vmatpush1.msra.mxu0 0.0
        %756 = vmatprep.subr.mxu0 0.0
        %757 = vmatpush1.msra.mxu0 0.0
        %758 = vmatprep.subr.mxu0 0.0
        %759 = vmatpush1.msra.mxu0 0.0
        %760 = vmatprep.subr.mxu0 0.0
        %761 = vmatpush1.msra.mxu0 0.0
        %762 = vmatprep.subr.mxu0 0.0
        %763 = vmatpush1.msra.mxu0 0.0
        %764 = vmatprep.subr.mxu0 0.0
        %765 = vmatpush1.msra.mxu0 0.0
        %766 = vmatprep.subr.mxu0 0.0
        %767 = vmatpush1.msra.mxu0 0.0
        %768 = vmatprep.subr.mxu0 0.0
        %769 = vmatpush1.msra.mxu0 0.0
        %770 = vmatprep.subr.mxu0 0.0
        %771 = vmatpush1.msra.mxu0 0.0
        %772 = vmatprep.subr.mxu0 0.0
        %773 = vmatpush1.msra.mxu0 0.0
        %774 = vmatprep.subr.mxu0 0.0
        %775 = vmatpush1.msra.mxu0 0.0
        %776 = vmatprep.subr.mxu0 0.0
        %777 = vmatpush1.msra.mxu0 0.0
        %778 = vmatprep.subr.mxu0 0.0
        %779 = vmatpush1.msra.mxu0 0.0
        %780 = vmatprep.subr.mxu0 %v315
        %781 = vmatpush1.msra.mxu0 %v314
        %782 = vmatprep.subr.mxu0 %v307
        %783 = vmatpush1.msra.mxu0 %v306
        %784 = vmatprep.subr.mxu0 0.0
        %785 = vmatpush2.msra.mxu0 0.0
        %786 = vmatprep.subr.mxu0 0.0
        %787 = vmatpush2.msra.mxu0 0.0
        %788 = vmatprep.subr.mxu0 0.0
        %789 = vmatpush2.msra.mxu0 0.0
        %790 = vmatprep.subr.mxu0 0.0
        %791 = vmatpush2.msra.mxu0 0.0
        %792 = vmatprep.subr.mxu0 0.0
        %793 = vmatpush2.msra.mxu0 0.0
        %794 = vmatprep.subr.mxu0 0.0
        %795 = vmatpush2.msra.mxu0 0.0
        %796 = vmatprep.subr.mxu0 0.0
        %797 = vmatpush2.msra.mxu0 0.0
        %798 = vmatprep.subr.mxu0 0.0
        %799 = vmatpush2.msra.mxu0 0.0
        %800 = vmatprep.subr.mxu0 0.0
        %801 = vmatpush2.msra.mxu0 0.0
        %802 = vmatprep.subr.mxu0 0.0
        %803 = vmatpush2.msra.mxu0 0.0
        %804 = vmatprep.subr.mxu0 0.0
        %805 = vmatpush2.msra.mxu0 0.0
        %806 = vmatprep.subr.mxu0 0.0
        %807 = vmatpush2.msra.mxu0 0.0
        %808 = vmatprep.subr.mxu0 0.0
        %809 = vmatpush2.msra.mxu0 0.0
        %810 = vmatprep.subr.mxu0 0.0
        %811 = vmatpush2.msra.mxu0 0.0
        %812 = vmatprep.subr.mxu0 0.0
        %813 = vmatpush2.msra.mxu0 0.0
        %814 = vmatprep.subr.mxu0 0.0
        %815 = vmatpush2.msra.mxu0 0.0
        %816 = vmatprep.mubr.f32.mxu0 0.0
        %817 = vmatmul.mubr.f32.gmra.mxu0 %v679
        %v818 = vpop.f32.mrf.mxu0
        %v819 = vadd.f32 %v676, %v818
        %v820 = vpop.f32.mrf.mxu0
        %v821 = vadd.f32 %v676, %v820
        %822 = vdwg.mxu0
        %823 = vmatprep.subr.mxu0 0.0
        %824 = vmatpush1.msra.mxu0 0.0
        %825 = vmatprep.subr.mxu0 0.0
        %826 = vmatpush1.msra.mxu0 0.0
        %827 = vmatprep.subr.mxu0 0.0
        %828 = vmatpush1.msra.mxu0 0.0
        %829 = vmatprep.subr.mxu0 0.0
        %830 = vmatpush1.msra.mxu0 0.0
        %831 = vmatprep.subr.mxu0 0.0
        %832 = vmatpush1.msra.mxu0 0.0
        %833 = vmatprep.subr.mxu0 0.0
        %834 = vmatpush1.msra.mxu0 0.0
        %835 = vmatprep.subr.mxu0 0.0
        %836 = vmatpush1.msra.mxu0 0.0
        %837 = vmatprep.subr.mxu0 0.0
        %838 = vmatpush1.msra.mxu0 0.0
        %839 = vmatprep.subr.mxu0 0.0
        %840 = vmatpush1.msra.mxu0 0.0
        %841 = vmatprep.subr.mxu0 0.0
        %842 = vmatpush1.msra.mxu0 0.0
        %843 = vmatprep.subr.mxu0 0.0
        %844 = vmatpush1.msra.mxu0 0.0
        %845 = vmatprep.subr.mxu0 0.0
        %846 = vmatpush1.msra.mxu0 0.0
        %847 = vmatprep.subr.mxu0 0.0
        %848 = vmatpush1.msra.mxu0 0.0
        %849 = vmatprep.subr.mxu0 0.0
        %850 = vmatpush1.msra.mxu0 0.0
        %851 = vmatprep.subr.mxu0 %v317
        %852 = vmatpush1.msra.mxu0 %v316
        %853 = vmatprep.subr.mxu0 %v309
        %854 = vmatpush1.msra.mxu0 %v308
        %855 = vmatprep.subr.mxu0 0.0
        %856 = vmatpush2.msra.mxu0 0.0
        %857 = vmatprep.subr.mxu0 0.0
        %858 = vmatpush2.msra.mxu0 0.0
        %859 = vmatprep.subr.mxu0 0.0
        %860 = vmatpush2.msra.mxu0 0.0
        %861 = vmatprep.subr.mxu0 0.0
        %862 = vmatpush2.msra.mxu0 0.0
        %863 = vmatprep.subr.mxu0 0.0
        %864 = vmatpush2.msra.mxu0 0.0
        %865 = vmatprep.subr.mxu0 0.0
        %866 = vmatpush2.msra.mxu0 0.0
        %867 = vmatprep.subr.mxu0 0.0
        %868 = vmatpush2.msra.mxu0 0.0
        %869 = vmatprep.subr.mxu0 0.0
        %870 = vmatpush2.msra.mxu0 0.0
        %871 = vmatprep.subr.mxu0 0.0
        %872 = vmatpush2.msra.mxu0 0.0
        %873 = vmatprep.subr.mxu0 0.0
        %874 = vmatpush2.msra.mxu0 0.0
        %875 = vmatprep.subr.mxu0 0.0
        %876 = vmatpush2.msra.mxu0 0.0
        %877 = vmatprep.subr.mxu0 0.0
        %878 = vmatpush2.msra.mxu0 0.0
        %879 = vmatprep.subr.mxu0 0.0
        %880 = vmatpush2.msra.mxu0 0.0
        %881 = vmatprep.subr.mxu0 0.0
        %882 = vmatpush2.msra.mxu0 0.0
        %883 = vmatprep.subr.mxu0 0.0
        %884 = vmatpush2.msra.mxu0 0.0
        %885 = vmatprep.subr.mxu0 0.0
        %886 = vmatpush2.msra.mxu0 0.0
        %887 = vmatprep.mubr.f32.mxu0 0.0
        %888 = vmatmul.mubr.f32.gmra.mxu0 %v679
        %v889 = vpop.f32.mrf.mxu0
        %v890 = vadd.f32 %v676, %v889
        %v891 = vpop.f32.mrf.mxu0
        %v892 = vadd.f32 %v676, %v891
        %893 = vdwg.mxu0
        %894 = vmatprep.subr.mxu0 0.0
        %895 = vmatpush1.msra.mxu0 0.0
        %896 = vmatprep.subr.mxu0 0.0
        %897 = vmatpush1.msra.mxu0 0.0
        %898 = vmatprep.subr.mxu0 0.0
        %899 = vmatpush1.msra.mxu0 0.0
        %900 = vmatprep.subr.mxu0 0.0
        %901 = vmatpush1.msra.mxu0 0.0
        %902 = vmatprep.subr.mxu0 0.0
        %903 = vmatpush1.msra.mxu0 0.0
        %904 = vmatprep.subr.mxu0 0.0
        %905 = vmatpush1.msra.mxu0 0.0
        %906 = vmatprep.subr.mxu0 0.0
        %907 = vmatpush1.msra.mxu0 0.0
        %908 = vmatprep.subr.mxu0 0.0
        %909 = vmatpush1.msra.mxu0 0.0
        %910 = vmatprep.subr.mxu0 0.0
        %911 = vmatpush1.msra.mxu0 0.0
        %912 = vmatprep.subr.mxu0 0.0
        %913 = vmatpush1.msra.mxu0 0.0
        %914 = vmatprep.subr.mxu0 0.0
        %915 = vmatpush1.msra.mxu0 0.0
        %916 = vmatprep.subr.mxu0 0.0
        %917 = vmatpush1.msra.mxu0 0.0
        %918 = vmatprep.subr.mxu0 0.0
        %919 = vmatpush1.msra.mxu0 0.0
        %920 = vmatprep.subr.mxu0 0.0
        %921 = vmatpush1.msra.mxu0 0.0
        %922 = vmatprep.subr.mxu0 %v319
        %923 = vmatpush1.msra.mxu0 %v318
        %924 = vmatprep.subr.mxu0 %v311
        %925 = vmatpush1.msra.mxu0 %v310
        %926 = vmatprep.subr.mxu0 0.0
        %927 = vmatpush2.msra.mxu0 0.0
        %928 = vmatprep.subr.mxu0 0.0
        %929 = vmatpush2.msra.mxu0 0.0
        %930 = vmatprep.subr.mxu0 0.0
        %931 = vmatpush2.msra.mxu0 0.0
        %932 = vmatprep.subr.mxu0 0.0
        %933 = vmatpush2.msra.mxu0 0.0
        %934 = vmatprep.subr.mxu0 0.0
        %935 = vmatpush2.msra.mxu0 0.0
        %936 = vmatprep.subr.mxu0 0.0
        %937 = vmatpush2.msra.mxu0 0.0
        %938 = vmatprep.subr.mxu0 0.0
        %939 = vmatpush2.msra.mxu0 0.0
        %940 = vmatprep.subr.mxu0 0.0
        %941 = vmatpush2.msra.mxu0 0.0
        %942 = vmatprep.subr.mxu0 0.0
        %943 = vmatpush2.msra.mxu0 0.0
        %944 = vmatprep.subr.mxu0 0.0
        %945 = vmatpush2.msra.mxu0 0.0
        %946 = vmatprep.subr.mxu0 0.0
        %947 = vmatpush2.msra.mxu0 0.0
        %948 = vmatprep.subr.mxu0 0.0
        %949 = vmatpush2.msra.mxu0 0.0
        %950 = vmatprep.subr.mxu0 0.0
        %951 = vmatpush2.msra.mxu0 0.0
        %952 = vmatprep.subr.mxu0 0.0
        %953 = vmatpush2.msra.mxu0 0.0
        %954 = vmatprep.subr.mxu0 0.0
        %955 = vmatpush2.msra.mxu0 0.0
        %956 = vmatprep.subr.mxu0 0.0
        %957 = vmatpush2.msra.mxu0 0.0
        %958 = vmatprep.mubr.f32.mxu0 0.0
        %959 = vmatmul.mubr.f32.gmra.mxu0 %v679
        %v960 = vpop.f32.mrf.mxu0
        %v961 = vadd.f32 %v676, %v960
        %v962 = vpop.f32.mrf.mxu0
        %v963 = vadd.f32 %v676, %v962
        %964 = vdwg.mxu0
        %v965 = vsub.f32 0.0, %v748
        %v966 = vsub.f32 0.0, %v750
        %v967 = vsub.f32 0.0, %v819
        %v968 = vsub.f32 0.0, %v821
        %v969 = vsub.f32 0.0, %v890
        %v970 = vsub.f32 0.0, %v892
        %v971 = vsub.f32 0.0, %v961
        %v972 = vsub.f32 0.0, %v963
        %v973 = vmul.f32 %v965, 1.442695
        %v974 = vpow.pop %v973
        %v975 = vmul.f32 %v966, 1.442695
        %v976 = vpow.pop %v975
        %v977 = vmul.f32 %v967, 1.442695
        %v978 = vpow.pop %v977
        %v979 = vmul.f32 %v968, 1.442695
        %v980 = vpow.pop %v979
        %v981 = vmul.f32 %v969, 1.442695
        %v982 = vpow.pop %v981
        %v983 = vmul.f32 %v970, 1.442695
        %v984 = vpow.pop %v983
        %v985 = vmul.f32 %v971, 1.442695
        %v986 = vpow.pop %v985
        %v987 = vmul.f32 %v972, 1.442695
        %v988 = vpow.pop %v987
        %v989 = vadd.f32 %v974, 1.0
        %v990 = vadd.f32 %v976, 1.0
        %v991 = vadd.f32 %v978, 1.0
        %v992 = vadd.f32 %v980, 1.0
        %v993 = vadd.f32 %v982, 1.0
        %v994 = vadd.f32 %v984, 1.0
        %v995 = vadd.f32 %v986, 1.0
        %v996 = vadd.f32 %v988, 1.0
        %v997 = vrcp.pop %v989
        %v998 = vrcp.pop %v990
        %v999 = vrcp.pop %v991
        %v1000 = vrcp.pop %v992
        %v1001 = vrcp.pop %v993
        %v1002 = vrcp.pop %v994
        %v1003 = vrcp.pop %v995
        %v1004 = vrcp.pop %v996
        %v1005 = vmul.f32 %v748, %v997
        %v1006 = vmul.f32 %v750, %v998
        %v1007 = vmul.f32 %v819, %v999
        %v1008 = vmul.f32 %v821, %v1000
        %v1009 = vmul.f32 %v890, %v1001
        %v1010 = vmul.f32 %v892, %v1002
        %v1011 = vmul.f32 %v961, %v1003
        %v1012 = vmul.f32 %v963, %v1004
        %1013 = vst [vmem:[%s300] sm:$0xff] %v1005
        %1014 = vst [vmem:[%s300 + $0x8] sm:$0xff] %v1006
        %1015 = vst [vmem:[%s300 + $0x10] sm:$0xff] %v1007
        %1016 = vst [vmem:[%s300 + $0x18] sm:$0xff] %v1008
        %1017 = vst [vmem:[%s300 + $0x20] sm:$0xff] %v1009
        %1018 = vst [vmem:[%s300 + $0x28] sm:$0xff] %v1010
        %1019 = vst [vmem:[%s300 + $0x30] sm:$0xff] %v1011
        %1020 = vst [vmem:[%s300 + $0x38] sm:$0xff] %v1012
        %s1021 = sand.u32 %s161, 1
        %s1022 = scalar_lea.sflag [#allocation4], %s1021
        %s1023 = sand.u32 %s161, 1
        %s1024 = smul.addr %s1023, 64
        %s1025 = scalar_lea.vmem [#allocation5], %s1024
        %s1026 = sand.u32 %s189, 1
        %s1027 = scalar_lea.sflag [#allocation7], %s1026
        %s1028 = sand.u32 %s189, 1
        %s1029 = smul.addr %s1028, 64
        %s1030 = scalar_lea.vmem [#allocation6], %s1029
        // Predicated region
        $region45: #{tpu_custom_call.1} parent=39 // pred_check
          %p1031 = pneg %p171
        $region46: #{tpu_custom_call.1} parent=39 // pred_check_branch
          %1033 = sbr.rel (%p1031) target = $region48
        $region47: #{tpu_custom_call.1} parent=39 // pred_region
          %s1034 = smul.u32 8, %s32
          %s1036 = ssub.s32 1024, 1024
          %1037 = vsyncadd %s1022, %s1036
          %s1038 = smul.addr %s31, 8
          %s1039 = sadd.s32 %s1034, %s1038
          %s1040 = smul.addr %s1039, 128
          %s1041 = scalar_lea.hbm %s5, %s1040
          %s1043 = sshll.u32 %s1025, 4
          %s1044 = int_to_ptr.vmem [resolvable:$true] %s1043
          %1046 = dma.vmem_to_hbm [thread:$0]  %s1044, 1024, %s1041, %s1022
        $region48: #{tpu_custom_call.1} parent=39 // pred_fallthru
          _
        // Predicated region
        $region49: #{tpu_custom_call.1} parent=39 // pred_check
          %p1047 = pneg %p199
        $region50: #{tpu_custom_call.1} parent=39 // pred_check_branch
          %1049 = sbr.rel (%p1047) target = $region52
        $region51: #{tpu_custom_call.1} parent=39 // pred_region
          %s1050 = smul.u32 8, %s32
          %s1052 = ssub.s32 1024, 1024
          %1053 = vsyncadd %s1027, %s1052
          %s1054 = smul.addr %s31, 8
          %s1055 = sadd.s32 %s1050, %s1054
          %s1056 = smul.addr %s1055, 128
          %s1057 = scalar_lea.hbm %s6, %s1056
          %s1059 = sshll.u32 %s1030, 4
          %s1060 = int_to_ptr.vmem [resolvable:$true] %s1059
          %1062 = dma.vmem_to_hbm [thread:$0]  %s1060, 1024, %s1057, %s1027
        $region52: #{tpu_custom_call.1} parent=39 // pred_fallthru
          _
      $region40: #{tpu_custom_call.1} parent=5 // pred_fallthru
        _
      %p1063 = scmp.le.s32.totalorder 2, %s22
      // Predicated region
      $region53: #{tpu_custom_call.1} parent=5 // pred_check
        %p1064 = pneg %p1063
      $region54: #{tpu_custom_call.1} parent=5 // pred_check_branch
        %1066 = sbr.rel (%p1064) target = $region56
      $region55: #{tpu_custom_call.1} parent=5 // pred_region
        %s1067 = ssub.s32 %s22, 2
        // Predicated region
        $region57: #{tpu_custom_call.1} parent=55 // pred_check
          %p1068 = pneg %p177
        $region58: #{tpu_custom_call.1} parent=55 // pred_check_branch
          %1070 = sbr.rel (%p1068) target = $region60
        $region59: #{tpu_custom_call.1} parent=55 // pred_region
          %s1071 = sand.u32 %s162, 1
          %s1072 = scalar_lea.sflag [#allocation4], %s1071
          %s1073 = sand.u32 %s162, 1
          %s1074 = smul.addr %s1073, 64
          %s1075 = scalar_lea.vmem [#allocation5], %s1074
          %1076 = dma.done %s1072, 1024
        $region60: #{tpu_custom_call.1} parent=55 // pred_fallthru
          _
        // Predicated region
        $region61: #{tpu_custom_call.1} parent=55 // pred_check
          %p1077 = pneg %p205
        $region62: #{tpu_custom_call.1} parent=55 // pred_check_branch
          %1079 = sbr.rel (%p1077) target = $region64
        $region63: #{tpu_custom_call.1} parent=55 // pred_region
          %s1080 = sand.u32 %s190, 1
          %s1081 = scalar_lea.sflag [#allocation7], %s1080
          %s1082 = sand.u32 %s190, 1
          %s1083 = smul.addr %s1082, 64
          %s1084 = scalar_lea.vmem [#allocation6], %s1083
          %1085 = dma.done %s1081, 1024
        $region64: #{tpu_custom_call.1} parent=55 // pred_fallthru
          _
      $region56: #{tpu_custom_call.1} parent=5 // pred_fallthru
        _
    $region6: #{tpu_custom_call.1} parent=1 // loop_footer
      %s26 = sadd.s32 1, %s22
    $region7: #{tpu_custom_call.1} parent=1 // loop_footer_branch
      %21 = sbr.rel target = $region3
    $region8: #{tpu_custom_call.1} parent=1 // loop_exit
      _
    %1086 = vsyncpa [#allocation3], 1
    %s1087 = scalar_lea.sflag [#allocation3], 1
    %1088 = vsyncpa %s1087, 1
    %1089 = vsyncpa [#allocation4], 1
    %s1090 = scalar_lea.sflag [#allocation4], 1
    %1091 = vsyncpa %s1090, 1
    %1092 = vsyncpa [#allocation7], 1
    %s1093 = scalar_lea.sflag [#allocation7], 1
    %1094 = vsyncpa %s1093, 1

</llo_original>
